<compile_context>
chip_gen: v5e
topology: v5e:2x2
jax: 0.10.0
libtpu: 0.0.40
codegen_flags: <defaults>
</compile_context>

<pallas_src>
import jax
import jax.numpy as jnp
import numpy as np
from jax.experimental import pallas as pl
from jax.experimental.pallas import tpu as pltpu


# ---------------------------------------------------------------------------
# Kernel: pure broadcast add.  x_ref: (N, Lt), prompt_ref: (1, Lt), o_ref: (N, Lt)
# ---------------------------------------------------------------------------
def _add_prompt_kernel(x_ref, prompt_ref, o_ref):
    o_ref[...] = x_ref[...] + prompt_ref[...]


# ---------------------------------------------------------------------------
# Wrapper-side helpers (parameter prep, not hot path)
# ---------------------------------------------------------------------------
def _border_mask(H, W, patch_size, prompt_size, dtype):
    """1 on the prompt border of each P x P tile, 0 in the interior; shape (H, W)."""
    row = jnp.arange(H, dtype=jnp.int32) % patch_size
    col = jnp.arange(W, dtype=jnp.int32) % patch_size
    r = (row < prompt_size) | (row >= patch_size - prompt_size)
    c = (col < prompt_size) | (col >= patch_size - prompt_size)
    return (r[:, None] | c[None, :]).astype(dtype)


def _pick_lane_tile(L, rows, itemsize, target_block_bytes=2 << 20):
    """Tile size along the flattened spatial axis (multiple of 128, divides L)."""
    if L % 128 != 0:
        # Fall back to a full-row block (block dim == array dim is always legal).
        return L
    max_elems = max(128, target_block_bytes // max(1, rows * itemsize))
    cand = min(L, (max_elems // 128) * 128)
    lt = None
    while cand >= 128:
        if L % cand == 0:
            lt = cand
            break
        cand -= 128
    if lt is None:
        lt = L
    # Prefer >= 2 grid steps so both v7x TensorCores get work (no-op on v5e/v6e).
    if lt == L and L % 256 == 0:
        lt = L // 2
    return lt


# ---------------------------------------------------------------------------
# Forward
# ---------------------------------------------------------------------------
def shared_prompter_forward(x, patch_param, patch_size, prompt_size, *, donate_x=False):
    """x: (N, 3, H, W); patch_param: (1, 3, P, P). Returns x + tiled(patch)*mask."""
    N, C, H, W = x.shape
    assert C == 3, "SharedPrompter expects 3 channels"
    assert H % patch_size == 0 and W % patch_size == 0, "H, W must be multiples of patch_size"
    assert 2 * prompt_size <= patch_size, "need 2*prompt_size <= patch_size"

    # --- glue: precompute the (batch-invariant) masked prompt plane once ------
    mask = _border_mask(H, W, patch_size, prompt_size, x.dtype)                      # (H, W)
    patch_tiled = jnp.tile(
        patch_param[0].astype(x.dtype), (1, H // patch_size, W // patch_size)
    )                                                                                 # (3, H, W)
    L = C * H * W
    prompt2 = (patch_tiled * mask[None, :, :]).reshape(1, L)                          # (1, L)

    # --- lane-dense layout + tiling -------------------------------------------
    x2 = x.reshape(N, L)
    itemsize = jnp.dtype(x.dtype).itemsize
    Lt = _pick_lane_tile(L, N, itemsize)
    grid = (L // Lt,)

    # Double-buffered VMEM budget: 2x(x block) + 2x(out block) + 2x(prompt tile).
    vmem_need = (4 * N * Lt + 2 * Lt) * itemsize
    vmem_limit = int(min(max(2 * vmem_need, 32 << 20), 48 << 20))

    out2 = pl.pallas_call(
        _add_prompt_kernel,
        out_shape=jax.ShapeDtypeStruct((N, L), x.dtype),
        grid_spec=pltpu.PrefetchScalarGridSpec(
            num_scalar_prefetch=0,
            grid=grid,
            in_specs=[
                # x: full batch, spatial tile s (block second-to-last dim == full N).
                pl.BlockSpec((N, Lt), lambda s: (0, s)),
                # prompt: indexed by spatial tile only -> fetched once per tile (1x traffic).
                pl.BlockSpec((1, Lt), lambda s: (0, s)),
            ],
            out_specs=pl.BlockSpec((N, Lt), lambda s: (0, s)),
        ),
        compiler_params=pltpu.CompilerParams(
            dimension_semantics=("parallel",),
            vmem_limit_bytes=vmem_limit,
        ),
        # Donate x's buffer to the output when the caller no longer needs x.
        input_output_aliases=({0: 0} if donate_x else {}),
    )(x2, prompt2)

    return out2.reshape(N, C, H, W)


# ---------------------------------------------------------------------------
# Pure-JAX reference matching the PyTorch forward
# ---------------------------------------------------------------------------
def _reference(x, patch_param, patch_size, prompt_size):
    N, C, H, W = x.shape
    fg = patch_size - 2 * prompt_size
    fg_in_patch = jnp.zeros((1, 3, fg, fg), x.dtype)
    fg_in_patch = jnp.pad(
        fg_in_patch,
        ((0, 0), (0, 0), (prompt_size, prompt_size), (prompt_size, prompt_size)),
        constant_values=1.0,
    )
    mask = jnp.tile(fg_in_patch, (1, 1, H // patch_size, W // patch_size))
    patch = jnp.tile(patch_param, (1, 1, H // patch_size, W // patch_size))
    return x + patch * mask


if __name__ == "__main__":
    patch_size = 16
    prompt_size = 2
    N, C, H, W = 2, 3, 32, 32  # two patch tiles per spatial dim

    key = jax.random.PRNGKey(0)
    kx, kp = jax.random.split(key)
    x = jax.random.normal(kx, (N, C, H, W), dtype=jnp.float32)
    # Deterministic init of the learned patch parameter (torch.randn equivalent).
    patch_param = jax.random.normal(kp, (1, 3, patch_size, patch_size), dtype=jnp.float32)

    out = shared_prompter_forward(x, patch_param, patch_size, prompt_size)
    out = jax.block_until_ready(out)

    ref = _reference(x, patch_param, patch_size, prompt_size)
    assert out.shape == x.shape and out.dtype == x.dtype
    np.testing.assert_allclose(np.asarray(out), np.asarray(ref), rtol=1e-6, atol=1e-6)

    print("KERNEL_OK")
</pallas_src>

<mosaic_0001>
module attributes {stable_mosaic.version = 11 : i64} {
  func.func @_add_prompt_kernel(%arg0: i32, %arg1: memref<2x1536xf32, #tpu.memory_space<vmem>>, %arg2: memref<1x1536xf32, #tpu.memory_space<vmem>>, %arg3: memref<2x1536xf32, #tpu.memory_space<vmem>>) attributes {dimension_semantics = [#tpu.dimension_semantics<parallel>], iteration_bounds = array<i64: 2>, scalar_prefetch = 0 : i64, scratch_operands = 0 : i64, tpu.core_type = #tpu.core_type<tc>, window_params = [{transform_indices = @transform_0, window_bounds = array<i64: 2, 1536>}, {transform_indices = @transform_1, window_bounds = array<i64: 1, 1536>}, {transform_indices = @transform_2, window_bounds = array<i64: 2, 1536>}]} {
    %c0 = arith.constant 0 : index
    %c0_0 = arith.constant 0 : index
    %0 = vector.load %arg1[%c0, %c0_0] : memref<2x1536xf32, #tpu.memory_space<vmem>>, vector<2x1536xf32>
    %c0_1 = arith.constant 0 : index
    %c0_2 = arith.constant 0 : index
    %1 = vector.load %arg2[%c0_1, %c0_2] : memref<1x1536xf32, #tpu.memory_space<vmem>>, vector<1x1536xf32>
    %2 = vector.broadcast %1 : vector<1x1536xf32> to vector<2x1536xf32>
    %3 = arith.addf %0, %2 : vector<2x1536xf32>
    %c0_3 = arith.constant 0 : index
    %c0_4 = arith.constant 0 : index
    %4 = vector.load %arg3[%c0_3, %c0_4] : memref<2x1536xf32, #tpu.memory_space<vmem>>, vector<2x1536xf32>
    tpu.vector_store %arg3[%c0_3, %c0_4], %3 {strides = array<i32>} : memref<2x1536xf32, #tpu.memory_space<vmem>>, vector<2x1536xf32>,
    return
  }
  func.func @transform_0(%arg0: i32) -> (i32, i32) {
    %c0_i32 = arith.constant 0 : i32
    %c0_i32_0 = arith.constant 0 : i32
    return %c0_i32, %arg0 : i32, i32
  }
  func.func @transform_1(%arg0: i32) -> (i32, i32) {
    %c0_i32 = arith.constant 0 : i32
    %c0_i32_0 = arith.constant 0 : i32
    return %c0_i32, %arg0 : i32, i32
  }
  func.func @transform_2(%arg0: i32) -> (i32, i32) {
    %c0_i32 = arith.constant 0 : i32
    %c0_i32_0 = arith.constant 0 : i32
    return %c0_i32, %arg0 : i32, i32
  }
}

</mosaic_0001>

<llo_original>
// kernel: tpu_custom_call.1
$region0: #{tpu_custom_call.1}
  #allocation0 [shape = 'u32[]', space=smem, size = 0x4, offset = 0x4, fixed_abs, tag = 'smem constant byte address 0x4 - core index']
  #allocation1 [shape = 'u32[72,128]{1,0:T(1,128)}', space=vmem, size = 0x9000, scoped, tag = 'internal scratch']
  %s0 = inlined_call_operand.hbm [shape: f32[2,3072], index: 0, kind: input, shape index: {}]
  %s1 = inlined_call_operand.hbm [shape: f32[1,3072], index: 1, kind: input, shape index: {}]
  %s2 = inlined_call_operand.hbm [shape: f32[2,3072], index: 2, kind: output, shape index: {}]
  %s3 = sld [smem:[#allocation0]]
  $region49: #{tpu_custom_call.1} parent=0
    _
  %s5 = ssub.s32 1, %s3
  %s6 = scalar_select 0, %s5, %s3
  $region1: #{tpu_custom_call.1} parent=0
    #allocation2 [shape = 'u8[24576]{0}', space=vmem, size = 0x6000, scoped, tag = 'input window, operand 0']
    #allocation3 [shape = 's32[2]{0}', space=sflag, size = 0x8, scoped, tag = 'scoped memory for tpu_custom_call.1']
    #allocation4 [shape = 's32[2]{0}', space=sflag, size = 0x8, scoped, tag = 'scoped memory for tpu_custom_call.1']
    #allocation5 [shape = 'u8[12288]{0}', space=vmem, size = 0x3000, scoped, tag = 'input window, operand 1']
    #allocation6 [shape = 's32[2]{0}', space=sflag, size = 0x8, scoped, tag = 'scoped memory for tpu_custom_call.1']
    #allocation7 [shape = 'u8[24576]{0}', space=vmem, size = 0x6000, scoped, tag = 'output window, operand 0']
    %7 = vsyncpa [#allocation3], 0
    %s8 = scalar_lea.sflag [#allocation3], 1
    %9 = vsyncpa %s8, 0
    %10 = vsyncpa [#allocation6], 0
    %s11 = scalar_lea.sflag [#allocation6], 1
    %12 = vsyncpa %s11, 0
    %13 = vsyncpa [#allocation4], 0
    %s14 = scalar_lea.sflag [#allocation4], 1
    %15 = vsyncpa %s14, 0
    loop: start=0, step=1, limit=4
    $region2: #{tpu_custom_call.1} parent=1 // loop_pre_header
      _
    $region3: #{tpu_custom_call.1} parent=1 // loop_header
      %s17 = sphi 0, %s21
      %p18 = scmp.ge.s32.totalorder %s17, 4
      %s27 = sphi 0, %s29
      %s30 = sphi 0, %s27
      %s31 = sphi 0, %s30
      %s47 = sphi 0, %s31
      %s53 = sphi 0, %s55
      %s56 = sphi 0, %s53
      %s57 = sphi 0, %s56
      %s73 = sphi 0, %s57
      %s79 = sphi 0, %s81
      %s82 = sphi 0, %s79
      %s83 = sphi 0, %s82
      %s99 = sphi 0, %s83
    $region4: #{tpu_custom_call.1} parent=1 // loop_header_branch
      %20 = sbr.rel (%p18) target = $region8
    $region5: #{tpu_custom_call.1} parent=1 // loop_body
      %s22 = ssub.s32 %s17, 1
      %s23 = ssub.s32 %s17, 2
      %s24 = sadd.s32 %s17, 1
      %s25 = ssub.s32 %s17, %s24
      %p26 = scmp.eq.s32.totalorder %s25, 0
      %s28 = sadd.s32 %s27, 1
      %s29 = scalar_select %p26, %s27, %s28
      %p32 = pneg %p26
      %p33 = scmp.eq.s32.totalorder %s17, 1
      %p34 = por %p32, %p33
      %p35 = scmp.ne.s32.totalorder %s27, %s30
      %p36 = scmp.eq.s32.totalorder %s17, 0
      %p37 = por %p35, %p36
      %p38 = scmp.ne.s32.totalorder %s27, %s30
      %p39 = scmp.eq.s32.totalorder %s22, 1
      %p40 = por %p38, %p39
      %p41 = scmp.ne.s32.totalorder %s30, %s31
      %p42 = scmp.eq.s32.totalorder %s22, 0
      %p43 = por %p41, %p42
      %p44 = scmp.ne.s32.totalorder %s30, %s31
      %p45 = scmp.eq.s32.totalorder %s23, 1
      %p46 = por %p44, %p45
      %p48 = scmp.ne.s32.totalorder %s31, %s47
      %p49 = scmp.eq.s32.totalorder %s23, 0
      %p50 = por %p48, %p49
      %s51 = ssub.s32 %s17, %s24
      %p52 = scmp.eq.s32.totalorder %s51, 0
      %s54 = sadd.s32 %s53, 1
      %s55 = scalar_select %p52, %s53, %s54
      %p58 = pneg %p52
      %p59 = scmp.eq.s32.totalorder %s17, 1
      %p60 = por %p58, %p59
      %p61 = scmp.ne.s32.totalorder %s53, %s56
      %p62 = scmp.eq.s32.totalorder %s17, 0
      %p63 = por %p61, %p62
      %p64 = scmp.ne.s32.totalorder %s53, %s56
      %p65 = scmp.eq.s32.totalorder %s22, 1
      %p66 = por %p64, %p65
      %p67 = scmp.ne.s32.totalorder %s56, %s57
      %p68 = scmp.eq.s32.totalorder %s22, 0
      %p69 = por %p67, %p68
      %p70 = scmp.ne.s32.totalorder %s56, %s57
      %p71 = scmp.eq.s32.totalorder %s23, 1
      %p72 = por %p70, %p71
      %p74 = scmp.ne.s32.totalorder %s57, %s73
      %p75 = scmp.eq.s32.totalorder %s23, 0
      %p76 = por %p74, %p75
      %s77 = ssub.s32 %s17, %s24
      %p78 = scmp.eq.s32.totalorder %s77, 0
      %s80 = sadd.s32 %s79, 1
      %s81 = scalar_select %p78, %s79, %s80
      %p84 = pneg %p78
      %p85 = scmp.eq.s32.totalorder %s17, 1
      %p86 = por %p84, %p85
      %p87 = scmp.ne.s32.totalorder %s79, %s82
      %p88 = scmp.eq.s32.totalorder %s17, 0
      %p89 = por %p87, %p88
      %p90 = scmp.ne.s32.totalorder %s79, %s82
      %p91 = scmp.eq.s32.totalorder %s22, 1
      %p92 = por %p90, %p91
      %p93 = scmp.ne.s32.totalorder %s82, %s83
      %p94 = scmp.eq.s32.totalorder %s22, 0
      %p95 = por %p93, %p94
      %p96 = scmp.ne.s32.totalorder %s82, %s83
      %p97 = scmp.eq.s32.totalorder %s23, 1
      %p98 = por %p96, %p97
      %p100 = scmp.ne.s32.totalorder %s83, %s99
      %p101 = scmp.eq.s32.totalorder %s23, 0
      %p102 = por %p100, %p101
      %p103 = scmp.le.s32.totalorder 1, %s17
      %p104 = scmp.lt.s32.totalorder %s17, 3
      %p105 = pnand %p103, %p104
      %p106 = pneg %p105
      // Predicated region
      $region9: #{tpu_custom_call.1} parent=5 // pred_check
        _
      $region10: #{tpu_custom_call.1} parent=5 // pred_check_branch
        %108 = sbr.rel (%p105) target = $region12
      $region11: #{tpu_custom_call.1} parent=5 // pred_region
        %s109 = ssub.s32 %s17, 1
      $region12: #{tpu_custom_call.1} parent=5 // pred_fallthru
        _
      %p110 = scmp.lt.s32.totalorder %s17, 2
      // Predicated region
      $region13: #{tpu_custom_call.1} parent=5 // pred_check
        %p111 = pneg %p110
      $region14: #{tpu_custom_call.1} parent=5 // pred_check_branch
        %113 = sbr.rel (%p111) target = $region16
      $region15: #{tpu_custom_call.1} parent=5 // pred_region
        // Predicated region
        $region17: #{tpu_custom_call.1} parent=15 // pred_check
          %p114 = pneg %p37
        $region18: #{tpu_custom_call.1} parent=15 // pred_check_branch
          %116 = sbr.rel (%p114) target = $region20
        $region19: #{tpu_custom_call.1} parent=15 // pred_region
          %s117 = sand.u32 %s27, 1
          %s118 = scalar_lea.sflag [#allocation3], %s117
          %s119 = sand.u32 %s27, 1
          %s120 = smul.addr %s119, 24
          %s121 = scalar_lea.vmem [#allocation2], %s120
          %s122 = smul.u32 12, %s17
          %124 = vsyncadd %s118, 0
          %s125 = smul.addr %s122, 2
          %s126 = scalar_lea.hbm %s0, %s125
          %s128 = sshll.u32 %s126, 4
          %s129 = int_to_ptr.hbm [resolvable:$true] %s128
          %s130 = sshll.u32 %s121, 4
          %s131 = int_to_ptr.vmem [resolvable:$true] %s130
          %133 = dma.hbm_to_vmem [thread:$0]  %s129, 384, %s131, %s118
        $region20: #{tpu_custom_call.1} parent=15 // pred_fallthru
          _
        // Predicated region
        $region21: #{tpu_custom_call.1} parent=15 // pred_check
          %p134 = pneg %p63
        $region22: #{tpu_custom_call.1} parent=15 // pred_check_branch
          %136 = sbr.rel (%p134) target = $region24
        $region23: #{tpu_custom_call.1} parent=15 // pred_region
          %s137 = sand.u32 %s53, 1
          %s138 = scalar_lea.sflag [#allocation6], %s137
          %s139 = sand.u32 %s53, 1
          %s140 = smul.addr %s139, 12
          %s141 = scalar_lea.vmem [#allocation5], %s140
          %s142 = smul.u32 12, %s17
          %144 = vsyncadd %s138, 0
          %s145 = scalar_lea.hbm %s1, %s142
          %s147 = sshll.u32 %s145, 4
          %s148 = int_to_ptr.hbm [resolvable:$true] %s147
          %s149 = sshll.u32 %s141, 4
          %s150 = int_to_ptr.vmem [resolvable:$true] %s149
          %152 = dma.hbm_to_vmem [thread:$0]  %s148, 192, %s150, %s138
        $region24: #{tpu_custom_call.1} parent=15 // pred_fallthru
          _
      $region16: #{tpu_custom_call.1} parent=5 // pred_fallthru
        _
      %p153 = scmp.le.s32.totalorder 1, %s17
      %p154 = scmp.lt.s32.totalorder %s17, 3
      %p155 = pnand %p153, %p154
      %p156 = pneg %p155
      // Predicated region
      $region25: #{tpu_custom_call.1} parent=5 // pred_check
        _
      $region26: #{tpu_custom_call.1} parent=5 // pred_check_branch
        %158 = sbr.rel (%p155) target = $region28
      $region27: #{tpu_custom_call.1} parent=5 // pred_region
        %s159 = ssub.s32 %s17, 1
        %s160 = sand.u32 %s30, 1
        %s161 = scalar_lea.sflag [#allocation3], %s160
        %s162 = sand.u32 %s30, 1
        %s163 = smul.addr %s162, 24
        %s164 = scalar_lea.vmem [#allocation2], %s163
        // Predicated region
        $region29: #{tpu_custom_call.1} parent=27 // pred_check
          %p165 = pneg %p43
        $region30: #{tpu_custom_call.1} parent=27 // pred_check_branch
          %167 = sbr.rel (%p165) target = $region32
        $region31: #{tpu_custom_call.1} parent=27 // pred_region
          %169 = dma.done %s161, 384
        $region32: #{tpu_custom_call.1} parent=27 // pred_fallthru
          _
        %s170 = sand.u32 %s56, 1
        %s171 = scalar_lea.sflag [#allocation6], %s170
        %s172 = sand.u32 %s56, 1
        %s173 = smul.addr %s172, 12
        %s174 = scalar_lea.vmem [#allocation5], %s173
        // Predicated region
        $region33: #{tpu_custom_call.1} parent=27 // pred_check
          %p175 = pneg %p69
        $region34: #{tpu_custom_call.1} parent=27 // pred_check_branch
          %177 = sbr.rel (%p175) target = $region36
        $region35: #{tpu_custom_call.1} parent=27 // pred_region
          %179 = dma.done %s171, 192
        $region36: #{tpu_custom_call.1} parent=27 // pred_fallthru
          _
        %s180 = sand.u32 %s30, 1
        %s181 = scalar_lea.sflag [#allocation3], %s180
        %s182 = sand.u32 %s30, 1
        %s183 = smul.addr %s182, 24
        %s184 = scalar_lea.vmem [#allocation2], %s183
        %p185 = pneg %p43
        %p186 = pneg %p40
        %s187 = sand.u32 %s56, 1
        %s188 = scalar_lea.sflag [#allocation6], %s187
        %s189 = sand.u32 %s56, 1
        %s190 = smul.addr %s189, 12
        %s191 = scalar_lea.vmem [#allocation5], %s190
        %p192 = pneg %p69
        %p193 = pneg %p66
        %p194 = pneg %p95
        %p195 = pneg %p92
        %s196 = sand.u32 %s82, 1
        %s197 = scalar_lea.sflag [#allocation4], %s196
        %s198 = sand.u32 %s82, 1
        %s199 = smul.addr %s198, 24
        %s200 = scalar_lea.vmem [#allocation7], %s199
        %s201 = smul.u32 12, %s22
        %s202 = smul.u32 12, %s22
        %s203 = smul.u32 12, %s22
        %v204 = vld [vmem:[%s164] sm:$0xff]
        %v205 = vld [vmem:[%s164 + $0x8] sm:$0xff]
        %v206 = vld [vmem:[%s164 + $0x10] sm:$0xff]
        %v207 = vld [vmem:[%s174] sm:$0xff]
        %v208 = vld [vmem:[%s174 + $0x8] sm:$0xf]
        %v211 = vperm.slane %v207, 0
        %v212 = vperm.slane %v207, 1
        %v213 = vperm.slane %v207, 2
        %v214 = vperm.slane %v207, 3
        %v215 = vperm.slane %v207, 4
        %v216 = vperm.slane %v207, 5
        %v217 = vperm.slane %v207, 6
        %v218 = vperm.slane %v207, 7
        %v219 = vperm.slane %v208, 0
        %v220 = vperm.slane %v208, 1
        %v221 = vperm.slane %v208, 2
        %v222 = vperm.slane %v208, 3
        %v223 = vrot.slane %v212, 6
        %v224 = vrot.slane %v213, 4
        %v225 = vrot.slane %v214, 2
        %v226 = vrot.slane %v216, 6
        %v227 = vrot.slane %v217, 4
        %v228 = vrot.slane %v218, 2
        %v229 = vrot.slane %v220, 6
        %v230 = vrot.slane %v221, 4
        %v231 = vrot.slane %v222, 2
        %vm232 = vcmask 1041408
        %v233 = vsel %vm232, %v211, %v223
        %vm234 = vcmask 1045508
        %v235 = vsel %vm234, %v224, %v225
        %vm236 = vcmask 1043456
        %v237 = vsel %vm236, %v233, %v235
        %v238 = vsel %vm232, %v215, %v226
        %v239 = vsel %vm234, %v227, %v228
        %v240 = vsel %vm236, %v238, %v239
        %v241 = vsel %vm232, %v219, %v229
        %v242 = vsel %vm234, %v230, %v231
        %v243 = vsel %vm236, %v241, %v242
        %v247 = vadd.f32 %v204, %v237
        %v248 = vadd.f32 %v205, %v240
        %v249 = vadd.f32 %v206, %v243
        %250 = vst [vmem:[%s200] sm:$0xff] %v247
        %251 = vst [vmem:[%s200 + $0x8] sm:$0xff] %v248
        %252 = vst [vmem:[%s200 + $0x10] sm:$0xff] %v249
        %s253 = sand.u32 %s82, 1
        %s254 = scalar_lea.sflag [#allocation4], %s253
        %s255 = sand.u32 %s82, 1
        %s256 = smul.addr %s255, 24
        %s257 = scalar_lea.vmem [#allocation7], %s256
        // Predicated region
        $region37: #{tpu_custom_call.1} parent=27 // pred_check
          %p258 = pneg %p92
        $region38: #{tpu_custom_call.1} parent=27 // pred_check_branch
          %260 = sbr.rel (%p258) target = $region40
        $region39: #{tpu_custom_call.1} parent=27 // pred_region
          %s261 = smul.u32 12, %s22
          %263 = vsyncadd %s254, 0
          %s264 = smul.addr %s261, 2
          %s265 = scalar_lea.hbm %s2, %s264
          %s267 = sshll.u32 %s257, 4
          %s268 = int_to_ptr.vmem [resolvable:$true] %s267
          %s269 = sshll.u32 %s265, 4
          %s270 = int_to_ptr.hbm [resolvable:$true] %s269
          %272 = dma.vmem_to_hbm [thread:$0]  %s268, 384, %s270, %s254
        $region40: #{tpu_custom_call.1} parent=27 // pred_fallthru
          _
      $region28: #{tpu_custom_call.1} parent=5 // pred_fallthru
        _
      %p273 = scmp.le.s32.totalorder 2, %s17
      // Predicated region
      $region41: #{tpu_custom_call.1} parent=5 // pred_check
        %p274 = pneg %p273
      $region42: #{tpu_custom_call.1} parent=5 // pred_check_branch
        %276 = sbr.rel (%p274) target = $region44
      $region43: #{tpu_custom_call.1} parent=5 // pred_region
        %s277 = ssub.s32 %s17, 2
        // Predicated region
        $region45: #{tpu_custom_call.1} parent=43 // pred_check
          %p278 = pneg %p98
        $region46: #{tpu_custom_call.1} parent=43 // pred_check_branch
          %280 = sbr.rel (%p278) target = $region48
        $region47: #{tpu_custom_call.1} parent=43 // pred_region
          %s281 = sand.u32 %s83, 1
          %s282 = scalar_lea.sflag [#allocation4], %s281
          %s283 = sand.u32 %s83, 1
          %s284 = smul.addr %s283, 24
          %s285 = scalar_lea.vmem [#allocation7], %s284
          %287 = dma.done %s282, 384
        $region48: #{tpu_custom_call.1} parent=43 // pred_fallthru
          _
      $region44: #{tpu_custom_call.1} parent=5 // pred_fallthru
        _
    $region6: #{tpu_custom_call.1} parent=1 // loop_footer
      %s21 = sadd.s32 1, %s17
    $region7: #{tpu_custom_call.1} parent=1 // loop_footer_branch
      %16 = sbr.rel target = $region3
    $region8: #{tpu_custom_call.1} parent=1 // loop_exit
      _
    %288 = vsyncpa [#allocation3], 1
    %s289 = scalar_lea.sflag [#allocation3], 1
    %290 = vsyncpa %s289, 1
    %291 = vsyncpa [#allocation6], 1
    %s292 = scalar_lea.sflag [#allocation6], 1
    %293 = vsyncpa %s292, 1
    %294 = vsyncpa [#allocation4], 1
    %s295 = scalar_lea.sflag [#allocation4], 1
    %296 = vsyncpa %s295, 1

</llo_original>
